<compile_context>
chip_gen: v6e
topology: v6e:2x2x1
jax: 0.10.0
libtpu: 0.0.40
codegen_flags: <defaults>
</compile_context>

<pallas_src>
import functools

import jax
import jax.numpy as jnp
from jax.experimental import pallas as pl
from jax.experimental.pallas import tpu as pltpu


def _rmsnorm_kernel(*refs, eps, d_x, d_model, has_bias):
    if has_bias:
        x_ref, scale_ref, offset_ref, o_ref = refs
    else:
        x_ref, scale_ref, o_ref = refs
        offset_ref = None

    x = x_ref[...].astype(jnp.float32)                         # (tile_rows, d)

    # Sum of squares over the (possibly partial) last axis.
    if d_x == d_model:
        sq = x * x
    else:
        col = jax.lax.broadcasted_iota(jnp.int32, x.shape, dimension=1)
        xp = jnp.where(col < d_x, x, 0.0)
        sq = xp * xp
    sq_sum = jnp.sum(sq, axis=-1, keepdims=True)               # (tile_rows, 1)
    norm_x = jnp.sqrt(sq_sum)
    denom = norm_x * (float(d_x) ** -0.5) + eps                # eps added AFTER sqrt (module semantics)

    # One reciprocal per row on the EUP, then a broadcast multiply on the VPU
    # (much cheaper than a full-tile divide).
    inv = pl.reciprocal(denom, approx=True)                    # (tile_rows, 1)

    scale = scale_ref[...].astype(jnp.float32)                 # (1, d)
    out = (x * inv) * scale
    if has_bias:
        out = out + offset_ref[...].astype(jnp.float32)
    o_ref[...] = out.astype(o_ref.dtype)


def rmsnorm(x, scale, offset=None, *, eps=1e-8, p=-1.0, tile_rows=None,
            target_block_bytes=4 << 20):
    """RMSNorm over the last axis. x: (..., d_model), scale/offset: (d_model,).

    tile_rows is the per-generation tuning knob (rows per grid step); if None it
    is auto-sized toward ~target_block_bytes per block (multiple of the dtype's
    sublane packing, capped at 1024 rows).
    """
    d_model = x.shape[-1]
    orig_shape = x.shape
    x2d = x.reshape(-1, d_model)
    rows = x2d.shape[0]
    itemsize = jnp.dtype(x.dtype).itemsize

    # Sublane packing: 8 rows for 4-byte dtypes, 16 for bf16, 32 for int8/fp8.
    sub = 8 * max(1, 4 // itemsize)

    if tile_rows is None:
        tile_rows = target_block_bytes // max(1, d_model * itemsize)
        tile_rows = min(1024, tile_rows)
    tile_rows = max(sub, (int(tile_rows) // sub) * sub)
    rows_up = pl.cdiv(rows, sub) * sub
    tile_rows = min(tile_rows, rows_up)

    if 0.0 <= p <= 1.0:
        d_x = int(d_model * p)           # partial RMSNorm: norm over first d_x lanes
    else:
        d_x = d_model

    scale2d = scale.reshape(1, d_model)
    inputs = [x2d, scale2d]
    in_specs = [
        pl.BlockSpec((tile_rows, d_model), lambda i: (i, 0)),
        pl.BlockSpec((1, d_model), lambda i: (0, 0)),
    ]
    has_bias = offset is not None
    if has_bias:
        inputs.append(offset.reshape(1, d_model))
        in_specs.append(pl.BlockSpec((1, d_model), lambda i: (0, 0)))

    # VMEM budget: double-buffered in/out blocks + f32 working tile + slack,
    # clamped so it never exceeds v7x's 64 MiB physical VMEM.
    block_bytes = tile_rows * d_model * itemsize
    vmem_needed = 4 * block_bytes + 2 * tile_rows * d_model * 4 + (2 << 20)
    vmem_limit = int(min(max(32 << 20, vmem_needed), 64 << 20))

    cost = pl.CostEstimate(
        flops=3 * rows * d_model,
        transcendentals=2 * rows,   # sqrt + reciprocal per row
        bytes_accessed=2 * rows * d_model * itemsize
        + d_model * jnp.dtype(scale.dtype).itemsize,
    )

    kernel = functools.partial(
        _rmsnorm_kernel, eps=eps, d_x=d_x, d_model=d_model, has_bias=has_bias)

    out = pl.pallas_call(
        kernel,
        out_shape=jax.ShapeDtypeStruct((rows, d_model), x.dtype),
        grid_spec=pltpu.PrefetchScalarGridSpec(
            num_scalar_prefetch=0,
            grid=(pl.cdiv(rows, tile_rows),),
            in_specs=in_specs,
            out_specs=pl.BlockSpec((tile_rows, d_model), lambda i: (i, 0)),
        ),
        compiler_params=pltpu.CompilerParams(
            dimension_semantics=("parallel",),
            vmem_limit_bytes=vmem_limit,
        ),
        cost_estimate=cost,
    )(*inputs)

    return out.reshape(orig_shape)


def rmsnorm_ref(x, scale, *, eps=1e-8):
    norm_x = jnp.linalg.norm(x, axis=-1, keepdims=True)
    rms_x = norm_x * (x.shape[-1] ** -0.5)
    return scale * (x / (rms_x + eps))


if __name__ == "__main__":
    key = jax.random.PRNGKey(0)

    # --- Main path: default (p disabled), scale initialized to ones as in __init__.
    # d_model kept a multiple of 128 for lane-dense loads/stores.
    batch, seq, d_model = 2, 8, 256
    x = jax.random.normal(key, (batch, seq, d_model), dtype=jnp.float32)
    scale = jnp.ones((d_model,), dtype=jnp.float32)

    out = jax.block_until_ready(rmsnorm(x, scale, eps=1e-8))
    ref = rmsnorm_ref(x, scale, eps=1e-8)
    assert out.shape == x.shape
    assert jnp.allclose(out, ref, atol=5e-3, rtol=5e-3), "mismatch vs reference"

    # --- Ragged-grid path: rows (3*5=15) not a multiple of tile_rows=8.
    x2 = jax.random.normal(jax.random.PRNGKey(1), (3, 5, 128), dtype=jnp.float32)
    s2 = jax.random.normal(jax.random.PRNGKey(2), (128,), dtype=jnp.float32)
    out2 = jax.block_until_ready(rmsnorm(x2, s2, tile_rows=8))
    ref2 = rmsnorm_ref(x2, s2)
    assert jnp.allclose(out2, ref2, atol=5e-3, rtol=5e-3), "ragged-grid mismatch"

    # --- Partial RMSNorm path (0 <= p <= 1).
    p = 0.5
    out3 = jax.block_until_ready(rmsnorm(x, scale, p=p))
    d_part = int(d_model * p)
    norm_p = jnp.linalg.norm(x[..., :d_part], axis=-1, keepdims=True)
    ref3 = scale * (x / (norm_p * (d_part ** -0.5) + 1e-8))
    assert jnp.allclose(out3, ref3, atol=5e-3, rtol=5e-3), "partial-p mismatch"

    print("KERNEL_OK")
</pallas_src>

<mosaic_0001>
module attributes {stable_mosaic.version = 11 : i64} {
  func.func @_rmsnorm_kernel(%arg0: i32, %arg1: memref<16x256xf32, #tpu.memory_space<vmem>>, %arg2: memref<1x256xf32, #tpu.memory_space<vmem>>, %arg3: memref<16x256xf32, #tpu.memory_space<vmem>>) attributes {dimension_semantics = [#tpu.dimension_semantics<parallel>], iteration_bounds = array<i64: 1>, scalar_prefetch = 0 : i64, scratch_operands = 0 : i64, tpu.core_type = #tpu.core_type<tc>, window_params = [{transform_indices = @transform_0, window_bounds = array<i64: 16, 256>}, {pipeline_mode = #tpu.pipeline_mode<synchronous>, transform_indices = @transform_1, window_bounds = array<i64: 1, 256>}, {transform_indices = @transform_2, window_bounds = array<i64: 16, 256>}]} {
    %c0 = arith.constant 0 : index
    %c0_0 = arith.constant 0 : index
    %0 = vector.load %arg1[%c0, %c0_0] : memref<16x256xf32, #tpu.memory_space<vmem>>, vector<16x256xf32>
    %1 = arith.mulf %0, %0 : vector<16x256xf32>
    %cst = arith.constant dense<0.000000e+00> : vector<16xf32>
    %2 = vector.multi_reduction <add>, %1, %cst [1] : vector<16x256xf32> to vector<16xf32>
    %3 = vector.shape_cast %2 : vector<16xf32> to vector<16x1xf32>
    %4 = math.sqrt %3 : vector<16x1xf32>
    %cst_1 = arith.constant 6.250000e-02 : f32
    %5 = vector.broadcast %cst_1 : f32 to vector<16x1xf32>
    %6 = arith.mulf %4, %5 : vector<16x1xf32>
    %cst_2 = arith.constant 9.99999993E-9 : f32
    %7 = vector.broadcast %cst_2 : f32 to vector<16x1xf32>
    %8 = arith.addf %6, %7 : vector<16x1xf32>
    %9 = tpu.reciprocal %8 {approx = true} : vector<16x1xf32> -> vector<16x1xf32>
    %c0_3 = arith.constant 0 : index
    %c0_4 = arith.constant 0 : index
    %10 = vector.load %arg2[%c0_3, %c0_4] : memref<1x256xf32, #tpu.memory_space<vmem>>, vector<1x256xf32>
    %11 = vector.broadcast %9 : vector<16x1xf32> to vector<16x256xf32>
    %12 = arith.mulf %0, %11 : vector<16x256xf32>
    %13 = vector.broadcast %10 : vector<1x256xf32> to vector<16x256xf32>
    %14 = arith.mulf %12, %13 : vector<16x256xf32>
    %c0_5 = arith.constant 0 : index
    %c0_6 = arith.constant 0 : index
    %15 = vector.load %arg3[%c0_5, %c0_6] : memref<16x256xf32, #tpu.memory_space<vmem>>, vector<16x256xf32>
    tpu.vector_store %arg3[%c0_5, %c0_6], %14 {strides = array<i32>} : memref<16x256xf32, #tpu.memory_space<vmem>>, vector<16x256xf32>,
    return
  }
  func.func @transform_0(%arg0: i32) -> (i32, i32) {
    %c0_i32 = arith.constant 0 : i32
    %c0_i32_0 = arith.constant 0 : i32
    return %arg0, %c0_i32 : i32, i32
  }
  func.func @transform_1(%arg0: i32) -> (i32, i32) {
    %c0_i32 = arith.constant 0 : i32
    %c0_i32_0 = arith.constant 0 : i32
    %c0_i32_1 = arith.constant 0 : i32
    return %c0_i32, %c0_i32_0 : i32, i32
  }
  func.func @transform_2(%arg0: i32) -> (i32, i32) {
    %c0_i32 = arith.constant 0 : i32
    %c0_i32_0 = arith.constant 0 : i32
    return %arg0, %c0_i32 : i32, i32
  }
}

</mosaic_0001>

<llo_original>
// kernel: tpu_custom_call.1
$region0: #{tpu_custom_call.1}
  #allocation0 [shape = 'u32[]', space=smem, size = 0x4, offset = 0x4, fixed_abs, tag = 'smem constant byte address 0x4 - core index']
  #allocation1 [shape = 'u32[144,128]{1,0:T(1,128)}', space=vmem, size = 0x12000, scoped, tag = 'internal scratch']
  %s0 = inlined_call_operand.hbm [shape: f32[16,256], index: 0, kind: input, shape index: {}]
  %s1 = inlined_call_operand.hbm [shape: f32[1,256], index: 1, kind: input, shape index: {}]
  %s2 = inlined_call_operand.hbm [shape: f32[16,256], index: 2, kind: output, shape index: {}]
  %s3 = sld [smem:[#allocation0]]
  $region26: #{tpu_custom_call.1} parent=0
    _
  %s5 = ssub.s32 1, %s3
  %s6 = scalar_select 0, %s5, %s3
  $region1: #{tpu_custom_call.1} parent=0
    #allocation2 [shape = 'u8[16384]{0}', space=vmem, size = 0x4000, scoped, tag = 'input window, operand 0, single buffered']
    #allocation3 [shape = 's32[1]{0}', space=sflag, size = 0x4, scoped, tag = 'scoped memory for tpu_custom_call.1']
    #allocation4 [shape = 's32[1]{0}', space=sflag, size = 0x4, scoped, tag = 'scoped memory for tpu_custom_call.1']
    #allocation5 [shape = 'u8[1024]{0}', space=vmem, size = 0x400, scoped, tag = 'input window, operand 1, single buffered']
    #allocation6 [shape = 's32[1]{0}', space=sflag, size = 0x4, scoped, tag = 'scoped memory for tpu_custom_call.1']
    #allocation7 [shape = 'u8[16384]{0}', space=vmem, size = 0x4000, scoped, tag = 'output window, operand 0, single buffered']
    %7 = vsyncpa [#allocation3], 0
    %8 = vsyncpa [#allocation6], 0
    %9 = vsyncpa [#allocation4], 0
    // Predicated region
    $region2: #{tpu_custom_call.1} parent=1 // pred_check
      _
    $region3: #{tpu_custom_call.1} parent=1 // pred_check_branch
      %11 = sbr.rel (0) target = $region5
    $region4: #{tpu_custom_call.1} parent=1 // pred_region
      %s13 = ssub.s32 512, 512
      %14 = vsyncadd [#allocation3], %s13
      %s15 = sshll.u32 [#allocation2], 4
      %s16 = int_to_ptr.vmem [resolvable:$true] %s15
      %21 = dma.hbm_to_vmem [thread:$0]  %s0, 512, %s16, [#allocation3], 256, 256, 16
    $region5: #{tpu_custom_call.1} parent=1 // pred_fallthru
      _
    // Predicated region
    $region6: #{tpu_custom_call.1} parent=1 // pred_check
      _
    $region7: #{tpu_custom_call.1} parent=1 // pred_check_branch
      %23 = sbr.rel (0) target = $region9
    $region8: #{tpu_custom_call.1} parent=1 // pred_region
      %s25 = ssub.s32 32, 32
      %26 = vsyncadd [#allocation6], %s25
      %s28 = sshll.u32 [#allocation5], 4
      %s29 = int_to_ptr.vmem [resolvable:$true] %s28
      %31 = dma.hbm_to_vmem [thread:$0]  %s1, 32, %s29, [#allocation6]
    $region9: #{tpu_custom_call.1} parent=1 // pred_fallthru
      _
    // Predicated region
    $region10: #{tpu_custom_call.1} parent=1 // pred_check
      _
    $region11: #{tpu_custom_call.1} parent=1 // pred_check_branch
      %33 = sbr.rel (0) target = $region13
    $region12: #{tpu_custom_call.1} parent=1 // pred_region
      %34 = dma.done [#allocation3], 512
    $region13: #{tpu_custom_call.1} parent=1 // pred_fallthru
      _
    // Predicated region
    $region14: #{tpu_custom_call.1} parent=1 // pred_check
      _
    $region15: #{tpu_custom_call.1} parent=1 // pred_check_branch
      %36 = sbr.rel (0) target = $region17
    $region16: #{tpu_custom_call.1} parent=1 // pred_region
      %37 = dma.done [#allocation6], 32
    $region17: #{tpu_custom_call.1} parent=1 // pred_fallthru
      _
    %v38 = vld [vmem:[#allocation2] sm:$0xff]
    %v39 = vld [vmem:[#allocation2 + $0x8] sm:$0xff]
    %v40 = vld [vmem:[#allocation2 + $0x10] sm:$0xff]
    %v41 = vld [vmem:[#allocation2 + $0x18] sm:$0xff]
    %v42 = vmul.f32 %v38, %v38
    %v43 = vmul.f32 %v39, %v39
    %v44 = vmul.f32 %v40, %v40
    %v45 = vmul.f32 %v41, %v41
    %v46 = vadd.f32 %v42, %v43
    %47 = vadd.xlane.f32.xlu0 %v46
    %v48 = vpop.xlane.xlu0 %47
    %v49 = vadd.f32 %v44, %v45
    %50 = vadd.xlane.f32.xlu0 %v49
    %v51 = vpop.xlane.xlu0 %50
    %v52 = vrsqrt.pop %v48
    %v53 = vmul.f32 %v48, %v52
    %vm54 = vcmp.eq.f32.partialorder %v48, inf
    %v55 = vsel %vm54, %v48, %v53
    %vm56 = vcmp.eq.f32.partialorder %v48, 0.0
    %v57 = vand.u32 %v48, 2147483648
    %v58 = vsel %vm56, %v57, %v55
    %v59 = vrsqrt.pop %v51
    %v60 = vmul.f32 %v51, %v59
    %vm61 = vcmp.eq.f32.partialorder %v51, inf
    %v62 = vsel %vm61, %v51, %v60
    %vm63 = vcmp.eq.f32.partialorder %v51, 0.0
    %v64 = vand.u32 %v51, 2147483648
    %v65 = vsel %vm63, %v64, %v62
    %v66 = vmul.f32 %v58, 0.0625
    %v67 = vmul.f32 %v65, 0.0625
    %v68 = vadd.f32 %v66, 1e-08
    %v69 = vadd.f32 %v67, 1e-08
    %v70 = vrcp.pop %v68
    %v71 = vrcp.pop %v69
    %v72 = vld [vmem:[#allocation5] sm:$0x3]
    %v73 = vmul.f32 %v38, %v70
    %v74 = vmul.f32 %v39, %v70
    %v75 = vmul.f32 %v40, %v71
    %v76 = vmul.f32 %v41, %v71
    %v78 = vlaneseq
    %v79 = vshrl.u32 %v78, 7
    %v80 = vsub.s32 0, %v79
    %v81 = vrot.slane %v72, %v80
    %v82 = vlaneseq
    %v83 = vshrl.u32 %v82, 7
    %v84 = vsub.s32 1, %v83
    %v85 = vrot.slane %v72, %v84
    %v88 = vmul.f32 %v73, %v81
    %v89 = vmul.f32 %v74, %v85
    %v90 = vmul.f32 %v75, %v81
    %v91 = vmul.f32 %v76, %v85
    %92 = vst [vmem:[#allocation7] sm:$0xff] %v88
    %93 = vst [vmem:[#allocation7 + $0x8] sm:$0xff] %v89
    %94 = vst [vmem:[#allocation7 + $0x10] sm:$0xff] %v90
    %95 = vst [vmem:[#allocation7 + $0x18] sm:$0xff] %v91
    // Predicated region
    $region18: #{tpu_custom_call.1} parent=1 // pred_check
      _
    $region19: #{tpu_custom_call.1} parent=1 // pred_check_branch
      %97 = sbr.rel (0) target = $region21
    $region20: #{tpu_custom_call.1} parent=1 // pred_region
      %s99 = ssub.s32 512, 512
      %100 = vsyncadd [#allocation4], %s99
      %s101 = sshll.u32 [#allocation7], 4
      %s102 = int_to_ptr.vmem [resolvable:$true] %s101
      %107 = dma.vmem_to_hbm [thread:$0]  %s102, 512, %s2, [#allocation4], 256, 256, 16
    $region21: #{tpu_custom_call.1} parent=1 // pred_fallthru
      _
    // Predicated region
    $region22: #{tpu_custom_call.1} parent=1 // pred_check
      _
    $region23: #{tpu_custom_call.1} parent=1 // pred_check_branch
      %109 = sbr.rel (0) target = $region25
    $region24: #{tpu_custom_call.1} parent=1 // pred_region
      %110 = dma.done [#allocation4], 512
    $region25: #{tpu_custom_call.1} parent=1 // pred_fallthru
      _
    %111 = vsyncpa [#allocation3], 1
    %112 = vsyncpa [#allocation6], 1
    %113 = vsyncpa [#allocation4], 1

</llo_original>
